<compile_context>
chip_gen: v7x
topology: tpu7x:2x2x1
jax: 0.10.0
libtpu: 0.0.40
codegen_flags: <defaults>
</compile_context>

<pallas_src>
import functools

import jax
import jax.numpy as jnp
from jax.experimental import pallas as pl
from jax.experimental.pallas import tpu as pltpu


def _round_up(x: int, m: int) -> int:
    return ((x + m - 1) // m) * m


def _mlp_kernel(h0_ref, hT_ref, w1a_ref, w1b_ref, b1_ref, w2_ref, b2_ref,
                out_ref):
    # h0/hT:  [TB, h_dim]
    # w1a/w1b:[h_dim, hidden_dim], b1: [1, hidden_dim]
    # w2:     [hidden_dim, n_pad], b2: [1, n_pad]   (n_pad = lane-dense width)
    # out:    [TB, n_pad]
    h = jnp.dot(h0_ref[...], w1a_ref[...], preferred_element_type=jnp.float32)
    h = h + jnp.dot(hT_ref[...], w1b_ref[...],
                    preferred_element_type=jnp.float32)
    h = jnp.maximum(h + b1_ref[...], 0.0)          # bias + ReLU (VPU filler)
    # Dropout(0.25): identity at inference time (no mask / no scaling).
    o = jnp.dot(h, w2_ref[...], preferred_element_type=jnp.float32)
    out_ref[...] = (o + b2_ref[...]).astype(out_ref.dtype)


@functools.partial(jax.jit, static_argnames=("block_b",))
def output_model_first_last(h_0, h_T, params, *, block_b: int = 256):
    """Forward pass of OutputModelFirstLast.

    h_0, h_T: [B, h_dim] float32
    params: dict with w1 [2*h_dim, hidden], b1 [hidden],
                      w2 [hidden, num_tasks], b2 [num_tasks]
    returns logits [B, num_tasks] float32
    """
    w1, b1, w2, b2 = params["w1"], params["b1"], params["w2"], params["b2"]
    B, h_dim = h_0.shape
    hidden_dim = w1.shape[1]
    num_tasks = w2.shape[1]

    # --- batch tiling -------------------------------------------------------
    # TB must be a multiple of 8 (sublane granule); pad B up to a multiple of
    # TB so every grid step sees a full tile.
    TB = min(block_b, _round_up(B, 8))
    B_pad = _round_up(B, TB)
    if B_pad != B:
        pad_rows = B_pad - B
        h_0 = jnp.pad(h_0, ((0, pad_rows), (0, 0)))
        h_T = jnp.pad(h_T, ((0, pad_rows), (0, 0)))

    # --- split fc1 weight, pad fc2 to a lane-dense (128-multiple) width -----
    w1a = w1[:h_dim, :]          # multiplies h_0
    w1b = w1[h_dim:, :]          # multiplies h_T
    n_pad = _round_up(num_tasks, 128)
    w2_p = jnp.pad(w2, ((0, 0), (0, n_pad - num_tasks)))
    b2_p = jnp.pad(b2, ((0, n_pad - num_tasks),)).reshape(1, n_pad)
    b1_2d = b1.reshape(1, hidden_dim)

    grid = (B_pad // TB,)

    out = pl.pallas_call(
        _mlp_kernel,
        out_shape=jax.ShapeDtypeStruct((B_pad, n_pad), jnp.float32),
        grid=grid,
        in_specs=[
            pl.BlockSpec((TB, h_dim), lambda i: (i, 0)),           # h_0 tile
            pl.BlockSpec((TB, h_dim), lambda i: (i, 0)),           # h_T tile
            pl.BlockSpec((h_dim, hidden_dim), lambda i: (0, 0)),   # w1a (resident)
            pl.BlockSpec((h_dim, hidden_dim), lambda i: (0, 0)),   # w1b (resident)
            pl.BlockSpec((1, hidden_dim), lambda i: (0, 0)),       # b1  (resident)
            pl.BlockSpec((hidden_dim, n_pad), lambda i: (0, 0)),   # w2  (resident)
            pl.BlockSpec((1, n_pad), lambda i: (0, 0)),            # b2  (resident)
        ],
        out_specs=pl.BlockSpec((TB, n_pad), lambda i: (i, 0)),
        compiler_params=pltpu.CompilerParams(
            dimension_semantics=("parallel",),
        ),
    )(h_0, h_T, w1a, w1b, b1_2d, w2_p, b2_p)

    return out[:B, :num_tasks]


def init_params(key, h_dim, num_tasks, hidden_dim=128):
    """Deterministic init matching nn.Linear shapes (Kaiming-uniform-ish)."""
    k1, k2, k3, k4 = jax.random.split(key, 4)
    in1 = h_dim * 2
    lim1 = 1.0 / jnp.sqrt(in1)
    lim2 = 1.0 / jnp.sqrt(hidden_dim)
    # Weights stored transposed to [in, out] so forward is x @ W.
    w1 = jax.random.uniform(k1, (in1, hidden_dim), jnp.float32, -lim1, lim1)
    b1 = jax.random.uniform(k2, (hidden_dim,), jnp.float32, -lim1, lim1)
    w2 = jax.random.uniform(k3, (hidden_dim, num_tasks), jnp.float32, -lim2, lim2)
    b2 = jax.random.uniform(k4, (num_tasks,), jnp.float32, -lim2, lim2)
    return {"w1": w1, "b1": b1, "w2": w2, "b2": b2}


def _reference(h_0, h_T, params):
    inp = jnp.concatenate([h_0, h_T], axis=1)
    h = jnp.maximum(inp @ params["w1"] + params["b1"], 0.0)
    return h @ params["w2"] + params["b2"]


if __name__ == "__main__":
    # Small shapes consistent with the module's forward.
    B, h_dim, hidden_dim, num_tasks = 8, 32, 128, 4

    key = jax.random.PRNGKey(0)
    kp, k0, kT = jax.random.split(key, 3)
    params = init_params(kp, h_dim, num_tasks, hidden_dim)
    h_0 = jax.random.normal(k0, (B, h_dim), jnp.float32)
    h_T = jax.random.normal(kT, (B, h_dim), jnp.float32)

    out = output_model_first_last(h_0, h_T, params)
    out = jax.block_until_ready(out)

    ref = _reference(h_0, h_T, params)
    assert out.shape == (B, num_tasks)
    assert jnp.allclose(out, ref, atol=1e-5, rtol=1e-5)

    # Also exercise a batch that needs padding / multiple grid steps.
    B2 = 300
    h_0b = jax.random.normal(k0, (B2, h_dim), jnp.float32)
    h_Tb = jax.random.normal(kT, (B2, h_dim), jnp.float32)
    out2 = jax.block_until_ready(
        output_model_first_last(h_0b, h_Tb, params, block_b=128))
    ref2 = _reference(h_0b, h_Tb, params)
    assert out2.shape == (B2, num_tasks)
    assert jnp.allclose(out2, ref2, atol=1e-5, rtol=1e-5)

    print("KERNEL_OK")
</pallas_src>

<mosaic_0001>
module attributes {stable_mosaic.version = 11 : i64} {
  func.func @_mlp_kernel(%arg0: i32, %arg1: memref<8x32xf32, #tpu.memory_space<vmem>>, %arg2: memref<8x32xf32, #tpu.memory_space<vmem>>, %arg3: memref<32x128xf32, #tpu.memory_space<vmem>>, %arg4: memref<32x128xf32, #tpu.memory_space<vmem>>, %arg5: memref<1x128xf32, #tpu.memory_space<vmem>>, %arg6: memref<128x128xf32, #tpu.memory_space<vmem>>, %arg7: memref<1x128xf32, #tpu.memory_space<vmem>>, %arg8: memref<8x128xf32, #tpu.memory_space<vmem>>) attributes {dimension_semantics = [#tpu.dimension_semantics<parallel>], iteration_bounds = array<i64: 1>, scalar_prefetch = 0 : i64, scratch_operands = 0 : i64, tpu.core_type = #tpu.core_type<tc>, window_params = [{transform_indices = @transform_0, window_bounds = array<i64: 8, 32>}, {transform_indices = @transform_1, window_bounds = array<i64: 8, 32>}, {pipeline_mode = #tpu.pipeline_mode<synchronous>, transform_indices = @transform_2, window_bounds = array<i64: 32, 128>}, {pipeline_mode = #tpu.pipeline_mode<synchronous>, transform_indices = @transform_3, window_bounds = array<i64: 32, 128>}, {pipeline_mode = #tpu.pipeline_mode<synchronous>, transform_indices = @transform_4, window_bounds = array<i64: 1, 128>}, {pipeline_mode = #tpu.pipeline_mode<synchronous>, transform_indices = @transform_5, window_bounds = array<i64: 128, 128>}, {pipeline_mode = #tpu.pipeline_mode<synchronous>, transform_indices = @transform_6, window_bounds = array<i64: 1, 128>}, {transform_indices = @transform_7, window_bounds = array<i64: 8, 128>}]} {
    %c0 = arith.constant 0 : index
    %c0_0 = arith.constant 0 : index
    %0 = vector.load %arg1[%c0, %c0_0] : memref<8x32xf32, #tpu.memory_space<vmem>>, vector<8x32xf32>
    %c0_1 = arith.constant 0 : index
    %c0_2 = arith.constant 0 : index
    %1 = vector.load %arg3[%c0_1, %c0_2] : memref<32x128xf32, #tpu.memory_space<vmem>>, vector<32x128xf32>
    %cst = arith.constant dense<0.000000e+00> : vector<8x128xf32>
    %2 = tpu.matmul %0, %1, %cst {dimension_numbers = #tpu.dot_dimension_numbers<[1], [0], [0], [1], [0, 0, 1, 1], [], []>} : vector<8x32xf32>, vector<32x128xf32>, vector<8x128xf32> -> vector<8x128xf32>
    %c0_3 = arith.constant 0 : index
    %c0_4 = arith.constant 0 : index
    %3 = vector.load %arg2[%c0_3, %c0_4] : memref<8x32xf32, #tpu.memory_space<vmem>>, vector<8x32xf32>
    %c0_5 = arith.constant 0 : index
    %c0_6 = arith.constant 0 : index
    %4 = vector.load %arg4[%c0_5, %c0_6] : memref<32x128xf32, #tpu.memory_space<vmem>>, vector<32x128xf32>
    %cst_7 = arith.constant dense<0.000000e+00> : vector<8x128xf32>
    %5 = tpu.matmul %3, %4, %cst_7 {dimension_numbers = #tpu.dot_dimension_numbers<[1], [0], [0], [1], [0, 0, 1, 1], [], []>} : vector<8x32xf32>, vector<32x128xf32>, vector<8x128xf32> -> vector<8x128xf32>
    %6 = arith.addf %2, %5 : vector<8x128xf32>
    %c0_8 = arith.constant 0 : index
    %c0_9 = arith.constant 0 : index
    %7 = vector.load %arg5[%c0_8, %c0_9] : memref<1x128xf32, #tpu.memory_space<vmem>>, vector<1x128xf32>
    %8 = vector.broadcast %7 : vector<1x128xf32> to vector<8x128xf32>
    %9 = arith.addf %6, %8 : vector<8x128xf32>
    %cst_10 = arith.constant 0.000000e+00 : f32
    %10 = vector.broadcast %cst_10 : f32 to vector<8x128xf32>
    %11 = arith.maximumf %9, %10 : vector<8x128xf32>
    %c0_11 = arith.constant 0 : index
    %c0_12 = arith.constant 0 : index
    %12 = vector.load %arg6[%c0_11, %c0_12] : memref<128x128xf32, #tpu.memory_space<vmem>>, vector<128x128xf32>
    %cst_13 = arith.constant dense<0.000000e+00> : vector<8x128xf32>
    %13 = tpu.matmul %11, %12, %cst_13 {dimension_numbers = #tpu.dot_dimension_numbers<[1], [0], [0], [1], [0, 0, 1, 1], [], []>} : vector<8x128xf32>, vector<128x128xf32>, vector<8x128xf32> -> vector<8x128xf32>
    %c0_14 = arith.constant 0 : index
    %c0_15 = arith.constant 0 : index
    %14 = vector.load %arg7[%c0_14, %c0_15] : memref<1x128xf32, #tpu.memory_space<vmem>>, vector<1x128xf32>
    %15 = vector.broadcast %14 : vector<1x128xf32> to vector<8x128xf32>
    %16 = arith.addf %13, %15 : vector<8x128xf32>
    %c0_16 = arith.constant 0 : index
    %c0_17 = arith.constant 0 : index
    %17 = vector.load %arg8[%c0_16, %c0_17] : memref<8x128xf32, #tpu.memory_space<vmem>>, vector<8x128xf32>
    tpu.vector_store %arg8[%c0_16, %c0_17], %16 {strides = array<i32>} : memref<8x128xf32, #tpu.memory_space<vmem>>, vector<8x128xf32>,
    return
  }
  func.func @transform_0(%arg0: i32) -> (i32, i32) {
    %c0_i32 = arith.constant 0 : i32
    %c0_i32_0 = arith.constant 0 : i32
    return %arg0, %c0_i32 : i32, i32
  }
  func.func @transform_1(%arg0: i32) -> (i32, i32) {
    %c0_i32 = arith.constant 0 : i32
    %c0_i32_0 = arith.constant 0 : i32
    return %arg0, %c0_i32 : i32, i32
  }
  func.func @transform_2(%arg0: i32) -> (i32, i32) {
    %c0_i32 = arith.constant 0 : i32
    %c0_i32_0 = arith.constant 0 : i32
    %c0_i32_1 = arith.constant 0 : i32
    return %c0_i32, %c0_i32_0 : i32, i32
  }
  func.func @transform_3(%arg0: i32) -> (i32, i32) {
    %c0_i32 = arith.constant 0 : i32
    %c0_i32_0 = arith.constant 0 : i32
    %c0_i32_1 = arith.constant 0 : i32
    return %c0_i32, %c0_i32_0 : i32, i32
  }
  func.func @transform_4(%arg0: i32) -> (i32, i32) {
    %c0_i32 = arith.constant 0 : i32
    %c0_i32_0 = arith.constant 0 : i32
    %c0_i32_1 = arith.constant 0 : i32
    return %c0_i32, %c0_i32_0 : i32, i32
  }
  func.func @transform_5(%arg0: i32) -> (i32, i32) {
    %c0_i32 = arith.constant 0 : i32
    %c0_i32_0 = arith.constant 0 : i32
    %c0_i32_1 = arith.constant 0 : i32
    return %c0_i32, %c0_i32_0 : i32, i32
  }
  func.func @transform_6(%arg0: i32) -> (i32, i32) {
    %c0_i32 = arith.constant 0 : i32
    %c0_i32_0 = arith.constant 0 : i32
    %c0_i32_1 = arith.constant 0 : i32
    return %c0_i32, %c0_i32_0 : i32, i32
  }
  func.func @transform_7(%arg0: i32) -> (i32, i32) {
    %c0_i32 = arith.constant 0 : i32
    %c0_i32_0 = arith.constant 0 : i32
    return %arg0, %c0_i32 : i32, i32
  }
}

</mosaic_0001>

<llo_original>
// kernel: output_model_first_last.1
$region0: #{output_model_first_last.1}
  #allocation0 [shape = 'u32[]', space=smem, size = 0x4, offset = 0x4, fixed_abs, tag = 'smem constant byte address 0x4 - core index']
  #allocation1 [shape = 'u32[144,128]{1,0:T(1,128)}', space=vmem, size = 0x12000, scoped, tag = 'internal scratch']
  %s0 = inlined_call_operand.vmem [shape: f32[8,32], index: 0, kind: input, shape index: {}]
  %s1 = inlined_call_operand.vmem [shape: f32[8,32], index: 1, kind: input, shape index: {}]
  %s2 = inlined_call_operand.vmem [shape: f32[32,128], index: 2, kind: input, shape index: {}]
  %s3 = inlined_call_operand.vmem [shape: f32[32,128], index: 3, kind: input, shape index: {}]
  %s4 = inlined_call_operand.vmem [shape: f32[1,128], index: 4, kind: input, shape index: {}]
  %s5 = inlined_call_operand.vmem [shape: f32[128,128], index: 5, kind: input, shape index: {}]
  %s6 = inlined_call_operand.vmem [shape: f32[1,128], index: 6, kind: input, shape index: {}]
  %s7 = inlined_call_operand.vmem [shape: f32[8,128], index: 7, kind: output, shape index: {}]
  %s8 = sld [smem:[#allocation0]]
  $region38: #{output_model_first_last.1} parent=0
    _
  %s10 = ssub.s32 1, %s8
  %s11 = scalar_select 0, %s10, %s8
  // Predicated region
  $region2: #{output_model_first_last.1} parent=0 // pred_check
    _
  $region3: #{output_model_first_last.1} parent=0 // pred_check_branch
    %13 = sbr.rel (0) target = $region5
  $region4: #{output_model_first_last.1} parent=0 // pred_region
    _
  $region5: #{output_model_first_last.1} parent=0 // pred_fallthru
    _
  // Predicated region
  $region6: #{output_model_first_last.1} parent=0 // pred_check
    _
  $region7: #{output_model_first_last.1} parent=0 // pred_check_branch
    %15 = sbr.rel (0) target = $region9
  $region8: #{output_model_first_last.1} parent=0 // pred_region
    _
  $region9: #{output_model_first_last.1} parent=0 // pred_fallthru
    _
  // Predicated region
  $region10: #{output_model_first_last.1} parent=0 // pred_check
    _
  $region11: #{output_model_first_last.1} parent=0 // pred_check_branch
    %17 = sbr.rel (0) target = $region13
  $region12: #{output_model_first_last.1} parent=0 // pred_region
    _
  $region13: #{output_model_first_last.1} parent=0 // pred_fallthru
    _
  // Predicated region
  $region14: #{output_model_first_last.1} parent=0 // pred_check
    _
  $region15: #{output_model_first_last.1} parent=0 // pred_check_branch
    %19 = sbr.rel (0) target = $region17
  $region16: #{output_model_first_last.1} parent=0 // pred_region
    _
  $region17: #{output_model_first_last.1} parent=0 // pred_fallthru
    _
  // Predicated region
  $region18: #{output_model_first_last.1} parent=0 // pred_check
    _
  $region19: #{output_model_first_last.1} parent=0 // pred_check_branch
    %21 = sbr.rel (0) target = $region21
  $region20: #{output_model_first_last.1} parent=0 // pred_region
    _
  $region21: #{output_model_first_last.1} parent=0 // pred_fallthru
    _
  // Predicated region
  $region22: #{output_model_first_last.1} parent=0 // pred_check
    _
  $region23: #{output_model_first_last.1} parent=0 // pred_check_branch
    %23 = sbr.rel (0) target = $region25
  $region24: #{output_model_first_last.1} parent=0 // pred_region
    _
  $region25: #{output_model_first_last.1} parent=0 // pred_fallthru
    _
  // Predicated region
  $region26: #{output_model_first_last.1} parent=0 // pred_check
    _
  $region27: #{output_model_first_last.1} parent=0 // pred_check_branch
    %25 = sbr.rel (0) target = $region29
  $region28: #{output_model_first_last.1} parent=0 // pred_region
    _
  $region29: #{output_model_first_last.1} parent=0 // pred_fallthru
    _
  %v26 = vld [vmem:[%s0] sm:$0xff]
  %v27 = vld [vmem:[%s2] sm:$0xff]
  %v28 = vld [vmem:[%s2 + $0x8] sm:$0xff]
  %v29 = vld [vmem:[%s2 + $0x10] sm:$0xff]
  %v30 = vld [vmem:[%s2 + $0x18] sm:$0xff]
  %v31 = vld [vmem:[%s1] sm:$0xff]
  %v32 = vld [vmem:[%s3] sm:$0xff]
  %v33 = vld [vmem:[%s3 + $0x8] sm:$0xff]
  %v34 = vld [vmem:[%s3 + $0x10] sm:$0xff]
  %v35 = vld [vmem:[%s3 + $0x18] sm:$0xff]
  %vm36 = vcmask 261120
  %v38 = vsel %vm36, %v31, 0
  %40 = vmatprep.subr.mxu0 0.0
  %41 = vmatpush1.msra.mxu0 %v32
  %42 = vmatprep.subr.mxu0 0.0
  %43 = vmatpush1.msra.mxu0 %v33
  %44 = vmatprep.subr.mxu0 0.0
  %45 = vmatpush1.msra.mxu0 %v34
  %46 = vmatprep.subr.mxu0 0.0
  %47 = vmatpush1.msra.mxu0 %v35
  %48 = vmatprep.subr.mxu0 0.0
  %49 = vmatpush1.msra.mxu0 0.0
  %50 = vmatprep.subr.mxu0 0.0
  %51 = vmatpush1.msra.mxu0 0.0
  %52 = vmatprep.subr.mxu0 0.0
  %53 = vmatpush1.msra.mxu0 0.0
  %54 = vmatprep.subr.mxu0 0.0
  %55 = vmatpush1.msra.mxu0 0.0
  %56 = vmatprep.subr.mxu0 0.0
  %57 = vmatpush1.msra.mxu0 0.0
  %58 = vmatprep.subr.mxu0 0.0
  %59 = vmatpush1.msra.mxu0 0.0
  %60 = vmatprep.subr.mxu0 0.0
  %61 = vmatpush1.msra.mxu0 0.0
  %62 = vmatprep.subr.mxu0 0.0
  %63 = vmatpush1.msra.mxu0 0.0
  %64 = vmatprep.subr.mxu0 0.0
  %65 = vmatpush1.msra.mxu0 0.0
  %66 = vmatprep.subr.mxu0 0.0
  %67 = vmatpush1.msra.mxu0 0.0
  %68 = vmatprep.subr.mxu0 0.0
  %69 = vmatpush1.msra.mxu0 0.0
  %70 = vmatprep.subr.mxu0 0.0
  %71 = vmatpush1.msra.mxu0 0.0
  %72 = vmatprep.subr.mxu0 0.0
  %73 = vmatpush1.msra.mxu0 0.0
  %74 = vmatprep.subr.mxu0 0.0
  %75 = vmatpush1.msra.mxu0 0.0
  %76 = vmatprep.subr.mxu0 0.0
  %77 = vmatpush1.msra.mxu0 0.0
  %78 = vmatprep.subr.mxu0 0.0
  %79 = vmatpush1.msra.mxu0 0.0
  %80 = vmatprep.subr.mxu0 0.0
  %81 = vmatpush1.msra.mxu0 0.0
  %82 = vmatprep.subr.mxu0 0.0
  %83 = vmatpush1.msra.mxu0 0.0
  %84 = vmatprep.subr.mxu0 0.0
  %85 = vmatpush1.msra.mxu0 0.0
  %86 = vmatprep.subr.mxu0 0.0
  %87 = vmatpush1.msra.mxu0 0.0
  %88 = vmatprep.subr.mxu0 0.0
  %89 = vmatpush1.msra.mxu0 0.0
  %90 = vmatprep.subr.mxu0 0.0
  %91 = vmatpush1.msra.mxu0 0.0
  %92 = vmatprep.subr.mxu0 0.0
  %93 = vmatpush1.msra.mxu0 0.0
  %94 = vmatprep.subr.mxu0 0.0
  %95 = vmatpush1.msra.mxu0 0.0
  %96 = vmatprep.subr.mxu0 0.0
  %97 = vmatpush1.msra.mxu0 0.0
  %98 = vmatprep.subr.mxu0 0.0
  %99 = vmatpush1.msra.mxu0 0.0
  %100 = vmatprep.subr.mxu0 0.0
  %101 = vmatpush1.msra.mxu0 0.0
  %102 = vmatprep.subr.mxu0 0.0
  %103 = vmatpush1.msra.mxu0 0.0
  %104 = vmatprep.mubr.f32.mxu0 0.0
  %105 = vmatmul.mubr.f32.gmra.mrb[0].mxu0 %v38
  %v106 = vpop.f32.mrb[0].mxu0
  %v107 = vadd.f32 0.0, %v106
  %v108 = vpop.f32.mrb[0].mxu0
  %109 = vdwg.mxu0
  %v111 = vsel %vm36, %v26, 0
  %113 = vmatprep.subr.mxu0 0.0
  %114 = vmatpush1.msra.mxu0 %v27
  %115 = vmatprep.subr.mxu0 0.0
  %116 = vmatpush1.msra.mxu0 %v28
  %117 = vmatprep.subr.mxu0 0.0
  %118 = vmatpush1.msra.mxu0 %v29
  %119 = vmatprep.subr.mxu0 0.0
  %120 = vmatpush1.msra.mxu0 %v30
  %121 = vmatprep.subr.mxu0 0.0
  %122 = vmatpush1.msra.mxu0 0.0
  %123 = vmatprep.subr.mxu0 0.0
  %124 = vmatpush1.msra.mxu0 0.0
  %125 = vmatprep.subr.mxu0 0.0
  %126 = vmatpush1.msra.mxu0 0.0
  %127 = vmatprep.subr.mxu0 0.0
  %128 = vmatpush1.msra.mxu0 0.0
  %129 = vmatprep.subr.mxu0 0.0
  %130 = vmatpush1.msra.mxu0 0.0
  %131 = vmatprep.subr.mxu0 0.0
  %132 = vmatpush1.msra.mxu0 0.0
  %133 = vmatprep.subr.mxu0 0.0
  %134 = vmatpush1.msra.mxu0 0.0
  %135 = vmatprep.subr.mxu0 0.0
  %136 = vmatpush1.msra.mxu0 0.0
  %137 = vmatprep.subr.mxu0 0.0
  %138 = vmatpush1.msra.mxu0 0.0
  %139 = vmatprep.subr.mxu0 0.0
  %140 = vmatpush1.msra.mxu0 0.0
  %141 = vmatprep.subr.mxu0 0.0
  %142 = vmatpush1.msra.mxu0 0.0
  %143 = vmatprep.subr.mxu0 0.0
  %144 = vmatpush1.msra.mxu0 0.0
  %145 = vmatprep.subr.mxu0 0.0
  %146 = vmatpush1.msra.mxu0 0.0
  %147 = vmatprep.subr.mxu0 0.0
  %148 = vmatpush1.msra.mxu0 0.0
  %149 = vmatprep.subr.mxu0 0.0
  %150 = vmatpush1.msra.mxu0 0.0
  %151 = vmatprep.subr.mxu0 0.0
  %152 = vmatpush1.msra.mxu0 0.0
  %153 = vmatprep.subr.mxu0 0.0
  %154 = vmatpush1.msra.mxu0 0.0
  %155 = vmatprep.subr.mxu0 0.0
  %156 = vmatpush1.msra.mxu0 0.0
  %157 = vmatprep.subr.mxu0 0.0
  %158 = vmatpush1.msra.mxu0 0.0
  %159 = vmatprep.subr.mxu0 0.0
  %160 = vmatpush1.msra.mxu0 0.0
  %161 = vmatprep.subr.mxu0 0.0
  %162 = vmatpush1.msra.mxu0 0.0
  %163 = vmatprep.subr.mxu0 0.0
  %164 = vmatpush1.msra.mxu0 0.0
  %165 = vmatprep.subr.mxu0 0.0
  %166 = vmatpush1.msra.mxu0 0.0
  %167 = vmatprep.subr.mxu0 0.0
  %168 = vmatpush1.msra.mxu0 0.0
  %169 = vmatprep.subr.mxu0 0.0
  %170 = vmatpush1.msra.mxu0 0.0
  %171 = vmatprep.subr.mxu0 0.0
  %172 = vmatpush1.msra.mxu0 0.0
  %173 = vmatprep.subr.mxu0 0.0
  %174 = vmatpush1.msra.mxu0 0.0
  %175 = vmatprep.subr.mxu0 0.0
  %176 = vmatpush1.msra.mxu0 0.0
  %177 = vmatprep.mubr.f32.mxu0 0.0
  %178 = vmatmul.mubr.f32.gmra.mrb[0].mxu0 %v111
  %v179 = vpop.f32.mrb[0].mxu0
  %v180 = vadd.f32 %v107, %v179
  %v181 = vpop.f32.mrb[0].mxu0
  %182 = vdwg.mxu0
  %v183 = vld [vmem:[%s4] sm:$0x1]
  %v185 = vlaneseq
  %v186 = vshrl.u32 %v185, 7
  %v187 = vsub.s32 0, %v186
  %v188 = vrot.slane %v183, %v187
  %v190 = vadd.f32 %v180, %v188
  %v191 = vmax.f32 %v190, 0.0
  %v192 = vld [vmem:[%s5] sm:$0xff]
  %v193 = vld [vmem:[%s5 + $0x8] sm:$0xff]
  %v194 = vld [vmem:[%s5 + $0x10] sm:$0xff]
  %v195 = vld [vmem:[%s5 + $0x18] sm:$0xff]
  %v196 = vld [vmem:[%s5 + $0x20] sm:$0xff]
  %v197 = vld [vmem:[%s5 + $0x28] sm:$0xff]
  %v198 = vld [vmem:[%s5 + $0x30] sm:$0xff]
  %v199 = vld [vmem:[%s5 + $0x38] sm:$0xff]
  %v200 = vld [vmem:[%s5 + $0x40] sm:$0xff]
  %v201 = vld [vmem:[%s5 + $0x48] sm:$0xff]
  %v202 = vld [vmem:[%s5 + $0x50] sm:$0xff]
  %v203 = vld [vmem:[%s5 + $0x58] sm:$0xff]
  %v204 = vld [vmem:[%s5 + $0x60] sm:$0xff]
  %v205 = vld [vmem:[%s5 + $0x68] sm:$0xff]
  %v206 = vld [vmem:[%s5 + $0x70] sm:$0xff]
  %v207 = vld [vmem:[%s5 + $0x78] sm:$0xff]
  %v208 = vld [vmem:[%s6] sm:$0x1]
  %v210 = vlaneseq
  %v211 = vshrl.u32 %v210, 7
  %v212 = vsub.s32 0, %v211
  %v213 = vrot.slane %v208, %v212
  %215 = vmatprep.subr.mxu0 0.0
  %216 = vmatpush1.msra.mxu0 %v192
  %217 = vmatprep.subr.mxu0 0.0
  %218 = vmatpush1.msra.mxu0 %v193
  %219 = vmatprep.subr.mxu0 0.0
  %220 = vmatpush1.msra.mxu0 %v194
  %221 = vmatprep.subr.mxu0 0.0
  %222 = vmatpush1.msra.mxu0 %v195
  %223 = vmatprep.subr.mxu0 0.0
  %224 = vmatpush1.msra.mxu0 %v196
  %225 = vmatprep.subr.mxu0 0.0
  %226 = vmatpush1.msra.mxu0 %v197
  %227 = vmatprep.subr.mxu0 0.0
  %228 = vmatpush1.msra.mxu0 %v198
  %229 = vmatprep.subr.mxu0 0.0
  %230 = vmatpush1.msra.mxu0 %v199
  %231 = vmatprep.subr.mxu0 0.0
  %232 = vmatpush1.msra.mxu0 %v200
  %233 = vmatprep.subr.mxu0 0.0
  %234 = vmatpush1.msra.mxu0 %v201
  %235 = vmatprep.subr.mxu0 0.0
  %236 = vmatpush1.msra.mxu0 %v202
  %237 = vmatprep.subr.mxu0 0.0
  %238 = vmatpush1.msra.mxu0 %v203
  %239 = vmatprep.subr.mxu0 0.0
  %240 = vmatpush1.msra.mxu0 %v204
  %241 = vmatprep.subr.mxu0 0.0
  %242 = vmatpush1.msra.mxu0 %v205
  %243 = vmatprep.subr.mxu0 0.0
  %244 = vmatpush1.msra.mxu0 %v206
  %245 = vmatprep.subr.mxu0 0.0
  %246 = vmatpush1.msra.mxu0 %v207
  %247 = vmatprep.subr.mxu0 0.0
  %248 = vmatpush1.msra.mxu0 0.0
  %249 = vmatprep.subr.mxu0 0.0
  %250 = vmatpush1.msra.mxu0 0.0
  %251 = vmatprep.subr.mxu0 0.0
  %252 = vmatpush1.msra.mxu0 0.0
  %253 = vmatprep.subr.mxu0 0.0
  %254 = vmatpush1.msra.mxu0 0.0
  %255 = vmatprep.subr.mxu0 0.0
  %256 = vmatpush1.msra.mxu0 0.0
  %257 = vmatprep.subr.mxu0 0.0
  %258 = vmatpush1.msra.mxu0 0.0
  %259 = vmatprep.subr.mxu0 0.0
  %260 = vmatpush1.msra.mxu0 0.0
  %261 = vmatprep.subr.mxu0 0.0
  %262 = vmatpush1.msra.mxu0 0.0
  %263 = vmatprep.subr.mxu0 0.0
  %264 = vmatpush1.msra.mxu0 0.0
  %265 = vmatprep.subr.mxu0 0.0
  %266 = vmatpush1.msra.mxu0 0.0
  %267 = vmatprep.subr.mxu0 0.0
  %268 = vmatpush1.msra.mxu0 0.0
  %269 = vmatprep.subr.mxu0 0.0
  %270 = vmatpush1.msra.mxu0 0.0
  %271 = vmatprep.subr.mxu0 0.0
  %272 = vmatpush1.msra.mxu0 0.0
  %273 = vmatprep.subr.mxu0 0.0
  %274 = vmatpush1.msra.mxu0 0.0
  %275 = vmatprep.subr.mxu0 0.0
  %276 = vmatpush1.msra.mxu0 0.0
  %277 = vmatprep.subr.mxu0 0.0
  %278 = vmatpush1.msra.mxu0 0.0
  %279 = vmatprep.mubr.f32.mxu0 0.0
  %280 = vmatmul.mubr.f32.gmra.mrb[0].mxu0 %v191
  %v281 = vpop.f32.mrb[0].mxu0
  %v282 = vadd.f32 %v213, %v281
  %v283 = vpop.f32.mrb[0].mxu0
  %284 = vdwg.mxu0
  %285 = vst [vmem:[%s7] sm:$0xff] %v282
  // Predicated region
  $region30: #{output_model_first_last.1} parent=0 // pred_check
    _
  $region31: #{output_model_first_last.1} parent=0 // pred_check_branch
    %287 = sbr.rel (0) target = $region33
  $region32: #{output_model_first_last.1} parent=0 // pred_region
    _
  $region33: #{output_model_first_last.1} parent=0 // pred_fallthru
    _
  // Predicated region
  $region34: #{output_model_first_last.1} parent=0 // pred_check
    _
  $region35: #{output_model_first_last.1} parent=0 // pred_check_branch
    %289 = sbr.rel (0) target = $region37
  $region36: #{output_model_first_last.1} parent=0 // pred_region
    _
  $region37: #{output_model_first_last.1} parent=0 // pred_fallthru
    _

</llo_original>
